<compile_context>
chip_gen: v5e
topology: v5e:2x2
jax: 0.10.0
libtpu: 0.0.40
codegen_flags: <defaults>
</compile_context>

<pallas_src>
import functools

import jax
import jax.numpy as jnp
from jax.experimental import pallas as pl
from jax.experimental.pallas import tpu as pltpu

_LANES = 128
_SUBLANES = 8
_MAX_BLOCK_ROWS = 4096   # (4096,128) f32 = 2 MiB per input per buffer
_CHUNK_ROWS = 512        # fold/accumulate the loss in <=256 KiB slabs


def _round_up(x, m):
    return -(-x // m) * m


def _chunk_loss(x_ref, t_ref, w_ref, r0, cr):
    x = x_ref[r0:r0 + cr, :].astype(jnp.float32)
    t = t_ref[r0:r0 + cr, :].astype(jnp.float32)
    # Equivalent to the PyTorch stable form:
    #   max_val = clamp(-x, min=0)
    #   x - x*t + max_val + log(exp(-max_val) + exp(-x - max_val))
    loss = jnp.maximum(x, 0.0) - x * t + jnp.log1p(jnp.exp(-jnp.abs(x)))
    if w_ref is not None:
        loss = loss * w_ref[r0:r0 + cr, :].astype(jnp.float32)
    return loss


def _partial_sum(x_ref, t_ref, w_ref, block_rows, chunk_rows, mask_info):
    """Sum the per-element loss of the current block into an (8, 128) slab."""
    acc = jnp.zeros((_SUBLANES, _LANES), jnp.float32)
    r0 = 0
    while r0 < block_rows:
        cr = min(chunk_rows, block_rows - r0)
        if mask_info is not None:
            vrows, rem = mask_info              # static, local to this block
            contributing = vrows + (1 if rem else 0)
            if r0 >= contributing:              # chunk is entirely padding
                r0 += cr
                continue
        loss = _chunk_loss(x_ref, t_ref, w_ref, r0, cr)
        if mask_info is not None:
            vrows, rem = mask_info
            thresh = vrows - r0                 # static Python int, >= 0 here
            if thresh < cr:                     # some rows in chunk need masking
                row = jax.lax.broadcasted_iota(jnp.int32, (cr, _LANES), 0)
                valid = row < thresh
                if rem:
                    lane = jax.lax.broadcasted_iota(jnp.int32, (cr, _LANES), 1)
                    valid = valid | ((row == thresh) & (lane < rem))
                loss = jnp.where(valid, loss, 0.0)
        # (cr,128) -> (cr//8, 8, 128) and sum the leading dim: pure vreg-wise
        # VPU adds; the single cross-lane reduce happens once in the wrapper.
        acc = acc + jnp.sum(
            loss.reshape(cr // _SUBLANES, _SUBLANES, _LANES), axis=0)
        r0 += cr
    return acc


def _wbce_kernel(*refs, block_rows, chunk_rows, num_blocks, has_weight,
                 mask_info):
    if has_weight:
        x_ref, t_ref, w_ref, o_ref = refs
    else:
        x_ref, t_ref, o_ref = refs
        w_ref = None

    if mask_info is None:
        o_ref[...] = _partial_sum(x_ref, t_ref, w_ref, block_rows, chunk_rows,
                                  None)
    elif num_blocks == 1:
        o_ref[...] = _partial_sum(x_ref, t_ref, w_ref, block_rows, chunk_rows,
                                  mask_info)
    else:
        # Keep the ragged-tail mask off the steady-state path: only the last
        # grid step pays for the iota/compare/select.
        is_last = pl.program_id(0) == num_blocks - 1

        @pl.when(jnp.logical_not(is_last))
        def _():
            o_ref[...] = _partial_sum(x_ref, t_ref, w_ref, block_rows,
                                      chunk_rows, None)

        @pl.when(is_last)
        def _():
            o_ref[...] = _partial_sum(x_ref, t_ref, w_ref, block_rows,
                                      chunk_rows, mask_info)


def weighted_bce_with_logits_loss(inp, target, weight=None, size_average=True):
    """JAX/Pallas equivalent of WeightedBCEWithLogitsLoss.forward."""
    if target.shape != inp.shape:
        raise ValueError(
            "Target size ({}) must be the same as input size ({})".format(
                target.shape, inp.shape))

    inp = jnp.asarray(inp)
    target = jnp.asarray(target)
    n_elems = inp.size

    x = inp.reshape(-1)
    t = target.reshape(-1)
    arrays = [x, t]

    scalar_weight = None
    has_weight = False
    if weight is not None:
        weight = jnp.asarray(weight)
        if weight.size == 1:
            # A scalar weight commutes with the sum; apply it to the result so
            # only two HBM streams are read (~1.5x on every chip generation).
            scalar_weight = weight.reshape(()).astype(jnp.float32)
        else:
            if weight.shape != inp.shape:
                # TODO(synk): stream small broadcastable weights (e.g. per-
                # channel) through their own small BlockSpec / SMEM and
                # broadcast on the VPU instead of materializing a full copy.
                weight = jnp.broadcast_to(weight, inp.shape)
            arrays.append(weight.reshape(-1))
            has_weight = True

    # Layout: view as (rows, 128).  Zero-copy when n_elems % 128 == 0.
    # TODO(synk): the rare non-multiple-of-128 case still pays one copy via
    # jnp.pad; a manual-DMA kernel over the flat array would avoid it.
    full_rows, rem_lanes = divmod(n_elems, _LANES)
    rows = full_rows + (1 if rem_lanes else 0)
    padded = rows * _LANES
    if padded != n_elems:
        arrays = [jnp.pad(a, (0, padded - n_elems)) for a in arrays]
    arrays = [a.reshape(rows, _LANES) for a in arrays]

    # Block size: as big as v5e's scoped-VMEM budget comfortably allows, but
    # split into >= 2 grid steps so v7x's two TensorCores both get work.
    block_rows = max(
        _SUBLANES,
        min(_MAX_BLOCK_ROWS, _round_up(pl.cdiv(rows, 2), _SUBLANES)))
    num_blocks = pl.cdiv(rows, block_rows)
    chunk_rows = min(_CHUNK_ROWS, block_rows)

    needs_mask = (rem_lanes != 0) or (rows % block_rows != 0)
    mask_info = None
    if needs_mask:
        last_start = (num_blocks - 1) * block_rows
        mask_info = (full_rows - last_start, rem_lanes)  # block-local, static

    kernel = functools.partial(
        _wbce_kernel,
        block_rows=block_rows,
        chunk_rows=chunk_rows,
        num_blocks=num_blocks,
        has_weight=has_weight,
        mask_info=mask_info,
    )

    blk = pl.BlockSpec((block_rows, _LANES), lambda i: (i, 0))

    # Explicit VMEM budget: double-buffered inputs + output, plus headroom.
    vmem_bytes = sum(2 * block_rows * _LANES * a.dtype.itemsize for a in arrays)
    vmem_bytes += 2 * _SUBLANES * _LANES * 4
    vmem_limit = int(max(vmem_bytes + (2 << 20), 16 << 20))  # <= ~18 MiB

    partials = pl.pallas_call(
        kernel,
        out_shape=jax.ShapeDtypeStruct((num_blocks * _SUBLANES, _LANES),
                                       jnp.float32),
        grid_spec=pl.GridSpec(
            grid=(num_blocks,),
            in_specs=[blk] * len(arrays),
            out_specs=pl.BlockSpec((_SUBLANES, _LANES), lambda i: (i, 0)),
        ),
        compiler_params=pltpu.CompilerParams(
            dimension_semantics=("parallel",),  # independent blocks -> 2-TC split
            vmem_limit_bytes=vmem_limit,
        ),
    )(*arrays)

    total = jnp.sum(partials)
    if scalar_weight is not None:
        total = total * scalar_weight
    if size_average:
        return total / n_elems
    return total


def _reference(inp, target, weight, size_average=True):
    # Direct transcription of the PyTorch formula.
    x = inp.astype(jnp.float32)
    t = target.astype(jnp.float32)
    max_val = jnp.maximum(-x, 0.0)
    loss = x - x * t + max_val + jnp.log(jnp.exp(-max_val) + jnp.exp(-x - max_val))
    if weight is not None:
        loss = loss * jnp.broadcast_to(jnp.asarray(weight, jnp.float32), x.shape)
    return jnp.mean(loss) if size_average else jnp.sum(loss)


if __name__ == "__main__":
    key = jax.random.PRNGKey(0)
    k1, k2, k3, k4, k5, k6, k7 = jax.random.split(key, 7)

    # 1) NCHW inputs with a full-size weight map (3-stream path, no mask).
    shape = (2, 4, 16, 16)
    logits = jax.random.normal(k1, shape, dtype=jnp.float32)
    target = (jax.random.uniform(k2, shape) > 0.5).astype(jnp.float32)
    weight = jax.random.uniform(k3, shape, dtype=jnp.float32)
    loss = jax.block_until_ready(
        weighted_bce_with_logits_loss(logits, target, weight, size_average=True))
    ref = _reference(logits, target, weight, size_average=True)
    assert jnp.allclose(loss, ref, rtol=1e-5, atol=1e-5), (loss, ref)

    # 2) Ragged size (not a multiple of 128), no weight, sum reduction:
    #    exercises the pad-to-128 path and the lane-level tail mask.
    shape2 = (2, 3, 7, 5)
    logits2 = jax.random.normal(k4, shape2, dtype=jnp.float32)
    target2 = (jax.random.uniform(k5, shape2) > 0.5).astype(jnp.float32)
    loss2 = jax.block_until_ready(
        weighted_bce_with_logits_loss(logits2, target2, None, size_average=False))
    ref2 = _reference(logits2, target2, None, size_average=False)
    assert jnp.allclose(loss2, ref2, rtol=1e-5, atol=1e-5), (loss2, ref2)

    # 3) Multiple of 128 but rows not a multiple of block_rows + scalar weight:
    #    exercises the pl.when last-block row mask and the 2-stream scalar path.
    shape3 = (3, 5, 40, 32)
    logits3 = jax.random.normal(k6, shape3, dtype=jnp.float32)
    target3 = (jax.random.uniform(k7, shape3) > 0.5).astype(jnp.float32)
    w_scalar = 0.37
    loss3 = jax.block_until_ready(
        weighted_bce_with_logits_loss(logits3, target3, w_scalar,
                                      size_average=True))
    ref3 = _reference(logits3, target3, w_scalar, size_average=True)
    assert jnp.allclose(loss3, ref3, rtol=1e-5, atol=1e-5), (loss3, ref3)

    # 4) Broadcastable per-channel weight (fallback broadcast path).
    w_chan = jnp.linspace(0.5, 2.0, shape[1]).reshape(1, shape[1], 1, 1)
    loss4 = jax.block_until_ready(
        weighted_bce_with_logits_loss(logits, target, w_chan, size_average=True))
    ref4 = _reference(logits, target, w_chan, size_average=True)
    assert jnp.allclose(loss4, ref4, rtol=1e-5, atol=1e-5), (loss4, ref4)

    print("KERNEL_OK")
</pallas_src>

<mosaic_0001>
module attributes {stable_mosaic.version = 11 : i64} {
  func.func @_wbce_kernel(%arg0: i32, %arg1: memref<8x128xf32, #tpu.memory_space<vmem>>, %arg2: memref<8x128xf32, #tpu.memory_space<vmem>>, %arg3: memref<8x128xf32, #tpu.memory_space<vmem>>, %arg4: memref<8x128xf32, #tpu.memory_space<vmem>>) attributes {dimension_semantics = [#tpu.dimension_semantics<parallel>], iteration_bounds = array<i64: 2>, scalar_prefetch = 0 : i64, scratch_operands = 0 : i64, tpu.core_type = #tpu.core_type<tc>, window_params = [{transform_indices = @transform_0, window_bounds = array<i64: 8, 128>}, {transform_indices = @transform_1, window_bounds = array<i64: 8, 128>}, {transform_indices = @transform_2, window_bounds = array<i64: 8, 128>}, {transform_indices = @transform_3, window_bounds = array<i64: 8, 128>}]} {
    %cst = arith.constant 0.000000e+00 : f32
    %0 = vector.broadcast %cst : f32 to vector<8x128xf32>
    %c0 = arith.constant 0 : index
    %c0_0 = arith.constant 0 : index
    %1 = vector.load %arg1[%c0, %c0_0] : memref<8x128xf32, #tpu.memory_space<vmem>>, vector<8x128xf32>
    %c0_1 = arith.constant 0 : index
    %c0_2 = arith.constant 0 : index
    %2 = vector.load %arg2[%c0_1, %c0_2] : memref<8x128xf32, #tpu.memory_space<vmem>>, vector<8x128xf32>
    %cst_3 = arith.constant 0.000000e+00 : f32
    %3 = vector.broadcast %cst_3 : f32 to vector<8x128xf32>
    %4 = arith.maximumf %1, %3 : vector<8x128xf32>
    %5 = arith.mulf %1, %2 : vector<8x128xf32>
    %6 = arith.subf %4, %5 : vector<8x128xf32>
    %7 = math.absf %1 : vector<8x128xf32>
    %cst_4 = arith.constant 0.000000e+00 : f32
    %8 = vector.broadcast %cst_4 : f32 to vector<8x128xf32>
    %9 = arith.subf %8, %7 : vector<8x128xf32>
    %10 = math.exp %9 : vector<8x128xf32>
    %11 = math.log1p %10 : vector<8x128xf32>
    %12 = arith.addf %6, %11 : vector<8x128xf32>
    %c0_5 = arith.constant 0 : index
    %c0_6 = arith.constant 0 : index
    %13 = vector.load %arg3[%c0_5, %c0_6] : memref<8x128xf32, #tpu.memory_space<vmem>>, vector<8x128xf32>
    %14 = arith.mulf %12, %13 : vector<8x128xf32>
    %15 = vector.shape_cast %14 : vector<8x128xf32> to vector<1x8x128xf32>
    %cst_7 = arith.constant dense<0.000000e+00> : vector<8x128xf32>
    %16 = vector.multi_reduction <add>, %15, %cst_7 [0] : vector<1x8x128xf32> to vector<8x128xf32>
    %17 = arith.addf %0, %16 : vector<8x128xf32>
    %c0_8 = arith.constant 0 : index
    %c0_9 = arith.constant 0 : index
    %18 = vector.load %arg4[%c0_8, %c0_9] : memref<8x128xf32, #tpu.memory_space<vmem>>, vector<8x128xf32>
    tpu.vector_store %arg4[%c0_8, %c0_9], %17 {strides = array<i32>} : memref<8x128xf32, #tpu.memory_space<vmem>>, vector<8x128xf32>,
    return
  }
  func.func @transform_0(%arg0: i32) -> (i32, i32) {
    %c0_i32 = arith.constant 0 : i32
    %c0_i32_0 = arith.constant 0 : i32
    return %arg0, %c0_i32 : i32, i32
  }
  func.func @transform_1(%arg0: i32) -> (i32, i32) {
    %c0_i32 = arith.constant 0 : i32
    %c0_i32_0 = arith.constant 0 : i32
    return %arg0, %c0_i32 : i32, i32
  }
  func.func @transform_2(%arg0: i32) -> (i32, i32) {
    %c0_i32 = arith.constant 0 : i32
    %c0_i32_0 = arith.constant 0 : i32
    return %arg0, %c0_i32 : i32, i32
  }
  func.func @transform_3(%arg0: i32) -> (i32, i32) {
    %c0_i32 = arith.constant 0 : i32
    %c0_i32_0 = arith.constant 0 : i32
    return %arg0, %c0_i32 : i32, i32
  }
}

</mosaic_0001>

<llo_original>
// kernel: tpu_custom_call.1
$region0: #{tpu_custom_call.1}
  #allocation0 [shape = 'u32[]', space=smem, size = 0x4, offset = 0x4, fixed_abs, tag = 'smem constant byte address 0x4 - core index']
  #allocation1 [shape = 'u32[72,128]{1,0:T(1,128)}', space=vmem, size = 0x9000, scoped, tag = 'internal scratch']
  %s0 = inlined_call_operand.hbm [shape: f32[16,128], index: 0, kind: input, shape index: {}]
  %s1 = inlined_call_operand.hbm [shape: f32[16,128], index: 1, kind: input, shape index: {}]
  %s2 = inlined_call_operand.hbm [shape: f32[16,128], index: 2, kind: input, shape index: {}]
  %s3 = inlined_call_operand.hbm [shape: f32[16,128], index: 3, kind: output, shape index: {}]
  %s4 = sld [smem:[#allocation0]]
  $region57: #{tpu_custom_call.1} parent=0
    _
  %s6 = ssub.s32 1, %s4
  %s7 = scalar_select 0, %s6, %s4
  $region1: #{tpu_custom_call.1} parent=0
    #allocation2 [shape = 'u8[8192]{0}', space=vmem, size = 0x2000, scoped, tag = 'input window, operand 0']
    #allocation3 [shape = 's32[2]{0}', space=sflag, size = 0x8, scoped, tag = 'scoped memory for tpu_custom_call.1']
    #allocation4 [shape = 's32[2]{0}', space=sflag, size = 0x8, scoped, tag = 'scoped memory for tpu_custom_call.1']
    #allocation5 [shape = 'u8[8192]{0}', space=vmem, size = 0x2000, scoped, tag = 'input window, operand 1']
    #allocation6 [shape = 's32[2]{0}', space=sflag, size = 0x8, scoped, tag = 'scoped memory for tpu_custom_call.1']
    #allocation7 [shape = 'u8[8192]{0}', space=vmem, size = 0x2000, scoped, tag = 'input window, operand 2']
    #allocation8 [shape = 'u8[8192]{0}', space=vmem, size = 0x2000, scoped, tag = 'output window, operand 0']
    %8 = vsyncpa [#allocation3], 0
    %s9 = scalar_lea.sflag [#allocation3], 1
    %10 = vsyncpa %s9, 0
    %11 = vsyncpa [#allocation6], 0
    %s12 = scalar_lea.sflag [#allocation6], 1
    %13 = vsyncpa %s12, 0
    %14 = vsyncpa [#allocation4], 0
    %s15 = scalar_lea.sflag [#allocation4], 1
    %16 = vsyncpa %s15, 0
    loop: start=0, step=1, limit=4
    $region2: #{tpu_custom_call.1} parent=1 // loop_pre_header
      _
    $region3: #{tpu_custom_call.1} parent=1 // loop_header
      %s18 = sphi 0, %s22
      %p19 = scmp.ge.s32.totalorder %s18, 4
      %s28 = sphi 0, %s30
      %s31 = sphi 0, %s28
      %s32 = sphi 0, %s31
      %s48 = sphi 0, %s32
      %s54 = sphi 0, %s56
      %s57 = sphi 0, %s54
      %s58 = sphi 0, %s57
      %s74 = sphi 0, %s58
      %s80 = sphi 0, %s82
      %s83 = sphi 0, %s80
      %s84 = sphi 0, %s83
      %s100 = sphi 0, %s84
      %s106 = sphi 0, %s108
      %s109 = sphi 0, %s106
      %s110 = sphi 0, %s109
      %s126 = sphi 0, %s110
    $region4: #{tpu_custom_call.1} parent=1 // loop_header_branch
      %21 = sbr.rel (%p19) target = $region8
    $region5: #{tpu_custom_call.1} parent=1 // loop_body
      %s23 = ssub.s32 %s18, 1
      %s24 = ssub.s32 %s18, 2
      %s25 = sadd.s32 %s18, 1
      %s26 = ssub.s32 %s18, %s25
      %p27 = scmp.eq.s32.totalorder %s26, 0
      %s29 = sadd.s32 %s28, 1
      %s30 = scalar_select %p27, %s28, %s29
      %p33 = pneg %p27
      %p34 = scmp.eq.s32.totalorder %s18, 1
      %p35 = por %p33, %p34
      %p36 = scmp.ne.s32.totalorder %s28, %s31
      %p37 = scmp.eq.s32.totalorder %s18, 0
      %p38 = por %p36, %p37
      %p39 = scmp.ne.s32.totalorder %s28, %s31
      %p40 = scmp.eq.s32.totalorder %s23, 1
      %p41 = por %p39, %p40
      %p42 = scmp.ne.s32.totalorder %s31, %s32
      %p43 = scmp.eq.s32.totalorder %s23, 0
      %p44 = por %p42, %p43
      %p45 = scmp.ne.s32.totalorder %s31, %s32
      %p46 = scmp.eq.s32.totalorder %s24, 1
      %p47 = por %p45, %p46
      %p49 = scmp.ne.s32.totalorder %s32, %s48
      %p50 = scmp.eq.s32.totalorder %s24, 0
      %p51 = por %p49, %p50
      %s52 = ssub.s32 %s18, %s25
      %p53 = scmp.eq.s32.totalorder %s52, 0
      %s55 = sadd.s32 %s54, 1
      %s56 = scalar_select %p53, %s54, %s55
      %p59 = pneg %p53
      %p60 = scmp.eq.s32.totalorder %s18, 1
      %p61 = por %p59, %p60
      %p62 = scmp.ne.s32.totalorder %s54, %s57
      %p63 = scmp.eq.s32.totalorder %s18, 0
      %p64 = por %p62, %p63
      %p65 = scmp.ne.s32.totalorder %s54, %s57
      %p66 = scmp.eq.s32.totalorder %s23, 1
      %p67 = por %p65, %p66
      %p68 = scmp.ne.s32.totalorder %s57, %s58
      %p69 = scmp.eq.s32.totalorder %s23, 0
      %p70 = por %p68, %p69
      %p71 = scmp.ne.s32.totalorder %s57, %s58
      %p72 = scmp.eq.s32.totalorder %s24, 1
      %p73 = por %p71, %p72
      %p75 = scmp.ne.s32.totalorder %s58, %s74
      %p76 = scmp.eq.s32.totalorder %s24, 0
      %p77 = por %p75, %p76
      %s78 = ssub.s32 %s18, %s25
      %p79 = scmp.eq.s32.totalorder %s78, 0
      %s81 = sadd.s32 %s80, 1
      %s82 = scalar_select %p79, %s80, %s81
      %p85 = pneg %p79
      %p86 = scmp.eq.s32.totalorder %s18, 1
      %p87 = por %p85, %p86
      %p88 = scmp.ne.s32.totalorder %s80, %s83
      %p89 = scmp.eq.s32.totalorder %s18, 0
      %p90 = por %p88, %p89
      %p91 = scmp.ne.s32.totalorder %s80, %s83
      %p92 = scmp.eq.s32.totalorder %s23, 1
      %p93 = por %p91, %p92
      %p94 = scmp.ne.s32.totalorder %s83, %s84
      %p95 = scmp.eq.s32.totalorder %s23, 0
      %p96 = por %p94, %p95
      %p97 = scmp.ne.s32.totalorder %s83, %s84
      %p98 = scmp.eq.s32.totalorder %s24, 1
      %p99 = por %p97, %p98
      %p101 = scmp.ne.s32.totalorder %s84, %s100
      %p102 = scmp.eq.s32.totalorder %s24, 0
      %p103 = por %p101, %p102
      %s104 = ssub.s32 %s18, %s25
      %p105 = scmp.eq.s32.totalorder %s104, 0
      %s107 = sadd.s32 %s106, 1
      %s108 = scalar_select %p105, %s106, %s107
      %p111 = pneg %p105
      %p112 = scmp.eq.s32.totalorder %s18, 1
      %p113 = por %p111, %p112
      %p114 = scmp.ne.s32.totalorder %s106, %s109
      %p115 = scmp.eq.s32.totalorder %s18, 0
      %p116 = por %p114, %p115
      %p117 = scmp.ne.s32.totalorder %s106, %s109
      %p118 = scmp.eq.s32.totalorder %s23, 1
      %p119 = por %p117, %p118
      %p120 = scmp.ne.s32.totalorder %s109, %s110
      %p121 = scmp.eq.s32.totalorder %s23, 0
      %p122 = por %p120, %p121
      %p123 = scmp.ne.s32.totalorder %s109, %s110
      %p124 = scmp.eq.s32.totalorder %s24, 1
      %p125 = por %p123, %p124
      %p127 = scmp.ne.s32.totalorder %s110, %s126
      %p128 = scmp.eq.s32.totalorder %s24, 0
      %p129 = por %p127, %p128
      %p130 = scmp.le.s32.totalorder 1, %s18
      %p131 = scmp.lt.s32.totalorder %s18, 3
      %p132 = pnand %p130, %p131
      %p133 = pneg %p132
      // Predicated region
      $region9: #{tpu_custom_call.1} parent=5 // pred_check
        _
      $region10: #{tpu_custom_call.1} parent=5 // pred_check_branch
        %135 = sbr.rel (%p132) target = $region12
      $region11: #{tpu_custom_call.1} parent=5 // pred_region
        %s136 = ssub.s32 %s18, 1
      $region12: #{tpu_custom_call.1} parent=5 // pred_fallthru
        _
      %p137 = scmp.lt.s32.totalorder %s18, 2
      // Predicated region
      $region13: #{tpu_custom_call.1} parent=5 // pred_check
        %p138 = pneg %p137
      $region14: #{tpu_custom_call.1} parent=5 // pred_check_branch
        %140 = sbr.rel (%p138) target = $region16
      $region15: #{tpu_custom_call.1} parent=5 // pred_region
        // Predicated region
        $region17: #{tpu_custom_call.1} parent=15 // pred_check
          %p141 = pneg %p38
        $region18: #{tpu_custom_call.1} parent=15 // pred_check_branch
          %143 = sbr.rel (%p141) target = $region20
        $region19: #{tpu_custom_call.1} parent=15 // pred_region
          %s144 = sand.u32 %s28, 1
          %s145 = scalar_lea.sflag [#allocation3], %s144
          %s146 = sand.u32 %s28, 1
          %s147 = smul.addr %s146, 8
          %s148 = scalar_lea.vmem [#allocation2], %s147
          %150 = vsyncadd %s145, 0
          %s151 = smul.addr %s18, 8
          %s152 = scalar_lea.hbm %s0, %s151
          %s154 = sshll.u32 %s152, 4
          %s155 = int_to_ptr.hbm [resolvable:$true] %s154
          %s156 = sshll.u32 %s148, 4
          %s157 = int_to_ptr.vmem [resolvable:$true] %s156
          %159 = dma.hbm_to_vmem [thread:$0]  %s155, 128, %s157, %s145
        $region20: #{tpu_custom_call.1} parent=15 // pred_fallthru
          _
        // Predicated region
        $region21: #{tpu_custom_call.1} parent=15 // pred_check
          %p160 = pneg %p64
        $region22: #{tpu_custom_call.1} parent=15 // pred_check_branch
          %162 = sbr.rel (%p160) target = $region24
        $region23: #{tpu_custom_call.1} parent=15 // pred_region
          %s163 = sand.u32 %s18, 1
          %s164 = scalar_lea.sflag [#allocation6], %s163
          %s165 = sand.u32 %s54, 1
          %s166 = smul.addr %s165, 8
          %s167 = scalar_lea.vmem [#allocation5], %s166
          %169 = vsyncadd %s164, 0
          %s170 = smul.addr %s18, 8
          %s171 = scalar_lea.hbm %s1, %s170
          %s173 = sshll.u32 %s171, 4
          %s174 = int_to_ptr.hbm [resolvable:$true] %s173
          %s175 = sshll.u32 %s167, 4
          %s176 = int_to_ptr.vmem [resolvable:$true] %s175
          %178 = dma.hbm_to_vmem [thread:$0]  %s174, 128, %s176, %s164
        $region24: #{tpu_custom_call.1} parent=15 // pred_fallthru
          _
        // Predicated region
        $region25: #{tpu_custom_call.1} parent=15 // pred_check
          %p179 = pneg %p90
        $region26: #{tpu_custom_call.1} parent=15 // pred_check_branch
          %181 = sbr.rel (%p179) target = $region28
        $region27: #{tpu_custom_call.1} parent=15 // pred_region
          %s182 = sand.u32 %s18, 1
          %s183 = scalar_lea.sflag [#allocation6], %s182
          %s184 = sand.u32 %s80, 1
          %s185 = smul.addr %s184, 8
          %s186 = scalar_lea.vmem [#allocation7], %s185
          %188 = vsyncadd %s183, 0
          %s189 = smul.addr %s18, 8
          %s190 = scalar_lea.hbm %s2, %s189
          %s192 = sshll.u32 %s190, 4
          %s193 = int_to_ptr.hbm [resolvable:$true] %s192
          %s194 = sshll.u32 %s186, 4
          %s195 = int_to_ptr.vmem [resolvable:$true] %s194
          %197 = dma.hbm_to_vmem [thread:$0]  %s193, 128, %s195, %s183
        $region28: #{tpu_custom_call.1} parent=15 // pred_fallthru
          _
      $region16: #{tpu_custom_call.1} parent=5 // pred_fallthru
        _
      %p198 = scmp.le.s32.totalorder 1, %s18
      %p199 = scmp.lt.s32.totalorder %s18, 3
      %p200 = pnand %p198, %p199
      %p201 = pneg %p200
      // Predicated region
      $region29: #{tpu_custom_call.1} parent=5 // pred_check
        _
      $region30: #{tpu_custom_call.1} parent=5 // pred_check_branch
        %203 = sbr.rel (%p200) target = $region32
      $region31: #{tpu_custom_call.1} parent=5 // pred_region
        %s204 = ssub.s32 %s18, 1
        %s205 = sand.u32 %s31, 1
        %s206 = scalar_lea.sflag [#allocation3], %s205
        %s207 = sand.u32 %s31, 1
        %s208 = smul.addr %s207, 8
        %s209 = scalar_lea.vmem [#allocation2], %s208
        // Predicated region
        $region33: #{tpu_custom_call.1} parent=31 // pred_check
          %p210 = pneg %p44
        $region34: #{tpu_custom_call.1} parent=31 // pred_check_branch
          %212 = sbr.rel (%p210) target = $region36
        $region35: #{tpu_custom_call.1} parent=31 // pred_region
          %214 = dma.done %s206, 128
        $region36: #{tpu_custom_call.1} parent=31 // pred_fallthru
          _
        %s215 = sand.u32 %s23, 1
        %s216 = scalar_lea.sflag [#allocation6], %s215
        %s217 = sand.u32 %s57, 1
        %s218 = smul.addr %s217, 8
        %s219 = scalar_lea.vmem [#allocation5], %s218
        // Predicated region
        $region37: #{tpu_custom_call.1} parent=31 // pred_check
          %p220 = pneg %p70
        $region38: #{tpu_custom_call.1} parent=31 // pred_check_branch
          %222 = sbr.rel (%p220) target = $region40
        $region39: #{tpu_custom_call.1} parent=31 // pred_region
          %224 = dma.done %s216, 128
        $region40: #{tpu_custom_call.1} parent=31 // pred_fallthru
          _
        %s225 = sand.u32 %s23, 1
        %s226 = scalar_lea.sflag [#allocation6], %s225
        %s227 = sand.u32 %s83, 1
        %s228 = smul.addr %s227, 8
        %s229 = scalar_lea.vmem [#allocation7], %s228
        // Predicated region
        $region41: #{tpu_custom_call.1} parent=31 // pred_check
          %p230 = pneg %p96
        $region42: #{tpu_custom_call.1} parent=31 // pred_check_branch
          %232 = sbr.rel (%p230) target = $region44
        $region43: #{tpu_custom_call.1} parent=31 // pred_region
          %234 = dma.done %s226, 128
        $region44: #{tpu_custom_call.1} parent=31 // pred_fallthru
          _
        %s235 = sand.u32 %s31, 1
        %s236 = scalar_lea.sflag [#allocation3], %s235
        %s237 = sand.u32 %s31, 1
        %s238 = smul.addr %s237, 8
        %s239 = scalar_lea.vmem [#allocation2], %s238
        %p240 = pneg %p44
        %p241 = pneg %p41
        %s242 = sand.u32 %s23, 1
        %s243 = scalar_lea.sflag [#allocation6], %s242
        %s244 = sand.u32 %s57, 1
        %s245 = smul.addr %s244, 8
        %s246 = scalar_lea.vmem [#allocation5], %s245
        %p247 = pneg %p70
        %p248 = pneg %p67
        %s249 = sand.u32 %s23, 1
        %s250 = scalar_lea.sflag [#allocation6], %s249
        %s251 = sand.u32 %s83, 1
        %s252 = smul.addr %s251, 8
        %s253 = scalar_lea.vmem [#allocation7], %s252
        %p254 = pneg %p96
        %p255 = pneg %p93
        %p256 = pneg %p122
        %p257 = pneg %p119
        %s258 = sand.u32 %s109, 1
        %s259 = scalar_lea.sflag [#allocation4], %s258
        %s260 = sand.u32 %s109, 1
        %s261 = smul.addr %s260, 8
        %s262 = scalar_lea.vmem [#allocation8], %s261
        %v263 = vld [vmem:[%s209] sm:$0xff]
        %v264 = vld [vmem:[%s219] sm:$0xff]
        %v265 = vmax.f32 %v263, 0.0
        %v266 = vmul.f32 %v263, %v264
        %v267 = vsub.f32 %v265, %v266
        %v268 = vand.u32 2147483647, %v263
        %v269 = vsub.f32 0.0, %v268
        %v270 = vmul.f32 %v269, 1.442695
        %v271 = vpow.pop %v270
        %v272 = vadd.f32 %v271, 1.0
        %v273 = vlog2.pop %v272
        %v274 = vmul.f32 %v273, 0.6931472
        %v275 = vmul.f32 -0.5, %v271
        %v276 = vadd.f32 %v275, 1.0
        %v277 = vmul.f32 %v276, %v271
        %v278 = vand.u32 2147483647, %v271
        %vm279 = vcmp.lt.f32.partialorder %v278, 0.0004427343
        %v280 = vsel %vm279, %v277, %v274
        %v281 = vadd.f32 %v267, %v280
        %v282 = vld [vmem:[%s229] sm:$0xff]
        %v283 = vmul.f32 %v281, %v282
        %v284 = vadd.f32 %v283, 0.0
        %v285 = vadd.f32 %v284, 0.0
        %286 = vst [vmem:[%s262] sm:$0xff] %v285
        %s287 = sand.u32 %s109, 1
        %s288 = scalar_lea.sflag [#allocation4], %s287
        %s289 = sand.u32 %s109, 1
        %s290 = smul.addr %s289, 8
        %s291 = scalar_lea.vmem [#allocation8], %s290
        // Predicated region
        $region45: #{tpu_custom_call.1} parent=31 // pred_check
          %p292 = pneg %p119
        $region46: #{tpu_custom_call.1} parent=31 // pred_check_branch
          %294 = sbr.rel (%p292) target = $region48
        $region47: #{tpu_custom_call.1} parent=31 // pred_region
          %296 = vsyncadd %s288, 0
          %s297 = smul.addr %s23, 8
          %s298 = scalar_lea.hbm %s3, %s297
          %s300 = sshll.u32 %s291, 4
          %s301 = int_to_ptr.vmem [resolvable:$true] %s300
          %s302 = sshll.u32 %s298, 4
          %s303 = int_to_ptr.hbm [resolvable:$true] %s302
          %305 = dma.vmem_to_hbm [thread:$0]  %s301, 128, %s303, %s288
        $region48: #{tpu_custom_call.1} parent=31 // pred_fallthru
          _
      $region32: #{tpu_custom_call.1} parent=5 // pred_fallthru
        _
      %p306 = scmp.le.s32.totalorder 2, %s18
      // Predicated region
      $region49: #{tpu_custom_call.1} parent=5 // pred_check
        %p307 = pneg %p306
      $region50: #{tpu_custom_call.1} parent=5 // pred_check_branch
        %309 = sbr.rel (%p307) target = $region52
      $region51: #{tpu_custom_call.1} parent=5 // pred_region
        %s310 = ssub.s32 %s18, 2
        // Predicated region
        $region53: #{tpu_custom_call.1} parent=51 // pred_check
          %p311 = pneg %p125
        $region54: #{tpu_custom_call.1} parent=51 // pred_check_branch
          %313 = sbr.rel (%p311) target = $region56
        $region55: #{tpu_custom_call.1} parent=51 // pred_region
          %s314 = sand.u32 %s110, 1
          %s315 = scalar_lea.sflag [#allocation4], %s314
          %s316 = sand.u32 %s110, 1
          %s317 = smul.addr %s316, 8
          %s318 = scalar_lea.vmem [#allocation8], %s317
          %320 = dma.done %s315, 128
        $region56: #{tpu_custom_call.1} parent=51 // pred_fallthru
          _
      $region52: #{tpu_custom_call.1} parent=5 // pred_fallthru
        _
    $region6: #{tpu_custom_call.1} parent=1 // loop_footer
      %s22 = sadd.s32 1, %s18
    $region7: #{tpu_custom_call.1} parent=1 // loop_footer_branch
      %17 = sbr.rel target = $region3
    $region8: #{tpu_custom_call.1} parent=1 // loop_exit
      _
    %321 = vsyncpa [#allocation3], 1
    %s322 = scalar_lea.sflag [#allocation3], 1
    %323 = vsyncpa %s322, 1
    %324 = vsyncpa [#allocation6], 1
    %s325 = scalar_lea.sflag [#allocation6], 1
    %326 = vsyncpa %s325, 1
    %327 = vsyncpa [#allocation4], 1
    %s328 = scalar_lea.sflag [#allocation4], 1
    %329 = vsyncpa %s328, 1

</llo_original>
